<compile_context>
chip_gen: v7x
topology: tpu7x:2x2x1
jax: 0.10.0
libtpu: 0.0.40
codegen_flags: <defaults>
</compile_context>

<pallas_src>
import jax
import jax.numpy as jnp
from jax.experimental import pallas as pl
from jax.experimental.pallas import tpu as pltpu


def _patch_embed_kernel(p_ref, w_ref, b_ref, o_ref):
    # p_ref: [TM, K] bf16   (patch rows for this grid step)
    # w_ref: [K,  N] bf16   (resident projection matrix)
    # b_ref: [1,  N] f32    (resident bias)
    # o_ref: [TM, N] out_dtype (bf16 by default)
    acc = jnp.dot(p_ref[...], w_ref[...], preferred_element_type=jnp.float32)
    o_ref[...] = (acc + b_ref[...]).astype(o_ref.dtype)


def _round_up(x, m):
    return ((x + m - 1) // m) * m


def swin_embedding(x, weight, bias, patch_size=4, tile_m=8192,
                   out_dtype=jnp.bfloat16):
    """x: [B, C, H, W] float32 (NCHW).
       weight: [emb, C, p, p] (PyTorch Conv2d OIHW layout). bias: [emb].
       Returns [B, Hp*Wp, emb] in `out_dtype`."""
    B, C, H, W = x.shape
    emb = weight.shape[0]
    p = patch_size
    Hp, Wp = H // p, W // p
    M = B * Hp * Wp
    K = C * p * p
    N = emb

    # --- glue: non-overlapping patches, flattened in (c, kh, kw) order ---
    # [B, C, Hp, p, Wp, p] -> [B, Hp, Wp, C, p, p] -> [M, K]; bf16 cast fuses
    # into the same transpose pass (and, with allow_input_fusion, ideally into
    # the pallas_call input DMA itself).
    xp = x.reshape(B, C, Hp, p, Wp, p)
    xp = jnp.transpose(xp, (0, 2, 4, 1, 3, 5))
    patches = xp.reshape(M, K).astype(jnp.bfloat16)

    # Conv weight [emb, C, p, p] -> dense projection [K, emb] in bf16.
    w_flat = weight.reshape(emb, K).T.astype(jnp.bfloat16)
    b_flat = bias.reshape(1, emb).astype(jnp.float32)

    # Tile over M. Ragged last block is clipped by the Pallas pipeline; tm is
    # kept a multiple of 8 whenever tm != M (the (8,128) block constraint).
    if M <= tile_m:
        tm = M
    else:
        # Clamp so grid_m >= 4: keeps both v7x TensorCores busy and leaves
        # >= 2 steps per core for double-buffering.  Harmless on v5e/v6e.
        tm = min(tile_m, max(8, _round_up(pl.cdiv(M, 4), 8)))
    grid_m = pl.cdiv(M, tm)

    out_bytes = jnp.dtype(out_dtype).itemsize
    cost = pl.CostEstimate(
        flops=2 * M * K * N,
        transcendentals=0,
        bytes_accessed=M * K * 2 + K * N * 2 + N * 4 + M * N * out_bytes,
    )

    out = pl.pallas_call(
        _patch_embed_kernel,
        out_shape=jax.ShapeDtypeStruct((M, N), out_dtype),
        grid=(grid_m,),
        in_specs=[
            pl.BlockSpec((tm, K), lambda i: (i, 0)),   # patches: tiled over M
            pl.BlockSpec((K, N), lambda i: (0, 0)),    # weight: resident
            pl.BlockSpec((1, N), lambda i: (0, 0)),    # bias: resident
        ],
        out_specs=pl.BlockSpec((tm, N), lambda i: (i, 0)),
        compiler_params=pltpu.CompilerParams(
            dimension_semantics=("parallel",),
            vmem_limit_bytes=32 * 1024 * 1024,
            # Let XLA fuse the patch transpose/cast into the input fetch so
            # `patches` need not round-trip through HBM.
            allow_input_fusion=[True, False, False],
        ),
        cost_estimate=cost,
    )(patches, w_flat, b_flat)

    # [M, emb] -> [B, Hp*Wp, emb]   (== 'b c h w -> b (h w) c')
    return out.reshape(B, Hp * Wp, emb)


if __name__ == "__main__":
    patch_size = 4
    emb_size = 96
    B, C, H, W = 2, 3, 16, 16  # Conv2d(3, emb) requires 3 input channels

    key = jax.random.PRNGKey(0)
    kx, kw, kb = jax.random.split(key, 3)
    x = jax.random.normal(kx, (B, C, H, W), dtype=jnp.float32)
    # deterministic synthetic parameters (PyTorch Conv2d weight/bias shapes)
    weight = jax.random.normal(kw, (emb_size, C, patch_size, patch_size),
                               dtype=jnp.float32) * 0.02
    bias = jax.random.normal(kb, (emb_size,), dtype=jnp.float32) * 0.02

    out = swin_embedding(x, weight, bias, patch_size=patch_size)
    out = jax.block_until_ready(out)

    # pure-JAX reference on bf16-rounded inputs (matches the kernel's math:
    # bf16 operands, f32 accumulation), strided conv == patch matmul.
    x_bf = x.astype(jnp.bfloat16).astype(jnp.float32)
    w_bf = weight.astype(jnp.bfloat16).astype(jnp.float32)
    ref = jax.lax.conv_general_dilated(
        x_bf, w_bf,
        window_strides=(patch_size, patch_size),
        padding="VALID",
        dimension_numbers=("NCHW", "OIHW", "NCHW"),
    ) + bias[None, :, None, None]
    ref = jnp.transpose(ref, (0, 2, 3, 1)).reshape(B, -1, emb_size)
    # kernel output is bf16: compare against a bf16-rounded reference.
    ref = ref.astype(jnp.bfloat16).astype(jnp.float32)

    assert out.shape == (B, (H // patch_size) * (W // patch_size), emb_size)
    assert jnp.allclose(out.astype(jnp.float32), ref, atol=2e-2, rtol=2e-2)
    print("KERNEL_OK")
</pallas_src>

<mosaic_0001>
module attributes {stable_mosaic.version = 11 : i64} {
  func.func @_patch_embed_kernel(%arg0: i32, %arg1: memref<32x48xbf16, #tpu.memory_space<vmem>>, %arg2: memref<48x96xbf16, #tpu.memory_space<vmem>>, %arg3: memref<1x96xf32, #tpu.memory_space<vmem>>, %arg4: memref<32x96xbf16, #tpu.memory_space<vmem>>) attributes {dimension_semantics = [#tpu.dimension_semantics<parallel>], iteration_bounds = array<i64: 1>, scalar_prefetch = 0 : i64, scratch_operands = 0 : i64, tpu.core_type = #tpu.core_type<tc>, window_params = [{transform_indices = @transform_0, window_bounds = array<i64: 32, 48>}, {pipeline_mode = #tpu.pipeline_mode<synchronous>, transform_indices = @transform_1, window_bounds = array<i64: 48, 96>}, {pipeline_mode = #tpu.pipeline_mode<synchronous>, transform_indices = @transform_2, window_bounds = array<i64: 1, 96>}, {transform_indices = @transform_3, window_bounds = array<i64: 32, 96>}]} {
    %c0 = arith.constant 0 : index
    %c0_0 = arith.constant 0 : index
    %0 = vector.load %arg1[%c0, %c0_0] : memref<32x48xbf16, #tpu.memory_space<vmem>>, vector<32x48xbf16>
    %c0_1 = arith.constant 0 : index
    %c0_2 = arith.constant 0 : index
    %1 = vector.load %arg2[%c0_1, %c0_2] : memref<48x96xbf16, #tpu.memory_space<vmem>>, vector<48x96xbf16>
    %cst = arith.constant dense<0.000000e+00> : vector<32x96xf32>
    %2 = tpu.matmul %0, %1, %cst {dimension_numbers = #tpu.dot_dimension_numbers<[1], [0], [0], [1], [0, 0, 1, 1], [], []>} : vector<32x48xbf16>, vector<48x96xbf16>, vector<32x96xf32> -> vector<32x96xf32>
    %c0_3 = arith.constant 0 : index
    %c0_4 = arith.constant 0 : index
    %3 = vector.load %arg3[%c0_3, %c0_4] : memref<1x96xf32, #tpu.memory_space<vmem>>, vector<1x96xf32>
    %4 = vector.broadcast %3 : vector<1x96xf32> to vector<32x96xf32>
    %5 = arith.addf %2, %4 : vector<32x96xf32>
    %6 = arith.truncf %5 : vector<32x96xf32> to vector<32x96xbf16>
    %c0_5 = arith.constant 0 : index
    %c0_6 = arith.constant 0 : index
    %7 = vector.load %arg4[%c0_5, %c0_6] : memref<32x96xbf16, #tpu.memory_space<vmem>>, vector<32x96xbf16>
    tpu.vector_store %arg4[%c0_5, %c0_6], %6 {strides = array<i32>} : memref<32x96xbf16, #tpu.memory_space<vmem>>, vector<32x96xbf16>,
    return
  }
  func.func @transform_0(%arg0: i32) -> (i32, i32) {
    %c0_i32 = arith.constant 0 : i32
    %c0_i32_0 = arith.constant 0 : i32
    return %arg0, %c0_i32 : i32, i32
  }
  func.func @transform_1(%arg0: i32) -> (i32, i32) {
    %c0_i32 = arith.constant 0 : i32
    %c0_i32_0 = arith.constant 0 : i32
    %c0_i32_1 = arith.constant 0 : i32
    return %c0_i32, %c0_i32_0 : i32, i32
  }
  func.func @transform_2(%arg0: i32) -> (i32, i32) {
    %c0_i32 = arith.constant 0 : i32
    %c0_i32_0 = arith.constant 0 : i32
    %c0_i32_1 = arith.constant 0 : i32
    return %c0_i32, %c0_i32_0 : i32, i32
  }
  func.func @transform_3(%arg0: i32) -> (i32, i32) {
    %c0_i32 = arith.constant 0 : i32
    %c0_i32_0 = arith.constant 0 : i32
    return %arg0, %c0_i32 : i32, i32
  }
}

</mosaic_0001>

<llo_original>
// kernel: tpu_custom_call.1
$region0: #{tpu_custom_call.1}
  #allocation0 [shape = 'u32[]', space=smem, size = 0x4, offset = 0x4, fixed_abs, tag = 'smem constant byte address 0x4 - core index']
  #allocation1 [shape = 'u32[144,128]{1,0:T(1,128)}', space=vmem, size = 0x12000, scoped, tag = 'internal scratch']
  %s0 = inlined_call_operand.hbm [shape: bf16[32,48], index: 0, kind: input, shape index: {}]
  %s1 = inlined_call_operand.hbm [shape: bf16[48,96], index: 1, kind: input, shape index: {}]
  %s2 = inlined_call_operand.vmem [shape: f32[1,96], index: 2, kind: input, shape index: {}]
  %s3 = inlined_call_operand.hbm [shape: bf16[32,96], index: 3, kind: output, shape index: {}]
  %s4 = sld [smem:[#allocation0]]
  $region30: #{tpu_custom_call.1} parent=0
    _
  %s6 = ssub.s32 1, %s4
  %s7 = scalar_select 0, %s6, %s4
  $region1: #{tpu_custom_call.1} parent=0
    #allocation2 [shape = 'u8[8192]{0}', space=vmem, size = 0x2000, scoped, tag = 'input window, operand 0, single buffered']
    #allocation3 [shape = 's32[1]{0}', space=sflag, size = 0x4, scoped, tag = 'scoped memory for tpu_custom_call.1']
    #allocation4 [shape = 's32[1]{0}', space=sflag, size = 0x4, scoped, tag = 'scoped memory for tpu_custom_call.1']
    #allocation5 [shape = 'u8[12288]{0}', space=vmem, size = 0x3000, scoped, tag = 'input window, operand 1, single buffered']
    #allocation6 [shape = 's32[1]{0}', space=sflag, size = 0x4, scoped, tag = 'scoped memory for tpu_custom_call.1']
    #allocation7 [shape = 'u8[8192]{0}', space=vmem, size = 0x2000, scoped, tag = 'output window, operand 0, single buffered']
    %8 = vsyncpa [#allocation3], 0
    %9 = vsyncpa [#allocation6], 0
    %10 = vsyncpa [#allocation4], 0
    // Predicated region
    $region2: #{tpu_custom_call.1} parent=1 // pred_check
      _
    $region3: #{tpu_custom_call.1} parent=1 // pred_check_branch
      %12 = sbr.rel (0) target = $region5
    $region4: #{tpu_custom_call.1} parent=1 // pred_region
      %s14 = ssub.s32 256, 256
      %15 = vsyncadd [#allocation3], %s14
      %s16 = sshll.u32 [#allocation2], 4
      %s17 = int_to_ptr.vmem [resolvable:$true] %s16
      %22 = dma.hbm_to_vmem [thread:$0]  %s0, 256, %s17, [#allocation3], 64, 64, 4
    $region5: #{tpu_custom_call.1} parent=1 // pred_fallthru
      _
    // Predicated region
    $region6: #{tpu_custom_call.1} parent=1 // pred_check
      _
    $region7: #{tpu_custom_call.1} parent=1 // pred_check_branch
      %24 = sbr.rel (0) target = $region9
    $region8: #{tpu_custom_call.1} parent=1 // pred_region
      %s26 = ssub.s32 384, 384
      %27 = vsyncadd [#allocation6], %s26
      %s28 = sshll.u32 [#allocation5], 4
      %s29 = int_to_ptr.vmem [resolvable:$true] %s28
      %34 = dma.hbm_to_vmem [thread:$0]  %s1, 384, %s29, [#allocation6], 64, 64, 4
    $region9: #{tpu_custom_call.1} parent=1 // pred_fallthru
      _
    // Predicated region
    $region10: #{tpu_custom_call.1} parent=1 // pred_check
      _
    $region11: #{tpu_custom_call.1} parent=1 // pred_check_branch
      %36 = sbr.rel (0) target = $region13
    $region12: #{tpu_custom_call.1} parent=1 // pred_region
      _
    $region13: #{tpu_custom_call.1} parent=1 // pred_fallthru
      _
    // Predicated region
    $region14: #{tpu_custom_call.1} parent=1 // pred_check
      _
    $region15: #{tpu_custom_call.1} parent=1 // pred_check_branch
      %38 = sbr.rel (0) target = $region17
    $region16: #{tpu_custom_call.1} parent=1 // pred_region
      %39 = dma.done [#allocation3], 256
    $region17: #{tpu_custom_call.1} parent=1 // pred_fallthru
      _
    // Predicated region
    $region18: #{tpu_custom_call.1} parent=1 // pred_check
      _
    $region19: #{tpu_custom_call.1} parent=1 // pred_check_branch
      %41 = sbr.rel (0) target = $region21
    $region20: #{tpu_custom_call.1} parent=1 // pred_region
      %42 = dma.done [#allocation6], 384
    $region21: #{tpu_custom_call.1} parent=1 // pred_fallthru
      _
    %v44 = vld [vmem:[#allocation2] sm:$0xf]
    %v45 = vld [vmem:[#allocation2 + $0x4] sm:$0xf]
    %v46 = vld [vmem:[#allocation2 + $0x8] sm:$0xf]
    %v47 = vld [vmem:[#allocation2 + $0xc] sm:$0xf]
    %v48 = vld [vmem:[#allocation5] sm:$0xf]
    %v49 = vld [vmem:[#allocation5 + $0x4] sm:$0xf]
    %v50 = vld [vmem:[#allocation5 + $0x8] sm:$0xf]
    %v51 = vld [vmem:[#allocation5 + $0xc] sm:$0xf]
    %v52 = vld [vmem:[#allocation5 + $0x10] sm:$0xf]
    %v53 = vld [vmem:[#allocation5 + $0x14] sm:$0xf]
    %v54 = vld [vmem:[%s2] sm:$0x1]
    %v56 = vlaneseq
    %v57 = vshrl.u32 %v56, 7
    %v58 = vsub.s32 0, %v57
    %v59 = vrot.slane %v54, %v58
    %v65 = vunpack.c.l.b16 %v44
    %v66 = vunpack.c.l.b16 %v45
    %v67 = vunpack.c.l.b16 %v46
    %v68 = vunpack.c.l.b16 %v47
    %v69 = vpack.c.b16 %v66, %v65
    %v70 = vpack.c.b16 %v68, %v67
    %v77 = vunpack.c.l.b16 %v48
    %v78 = vunpack.c.l.b16 %v49
    %v79 = vunpack.c.l.b16 %v50
    %v80 = vunpack.c.l.b16 %v51
    %v81 = vunpack.c.l.b16 %v52
    %v82 = vunpack.c.l.b16 %v53
    %v83 = vpack.c.b16 %v78, %v77
    %v84 = vpack.c.b16 %v80, %v79
    %v85 = vpack.c.b16 %v82, %v81
    %vm89 = vcmask 392192
    %v91 = vsel %vm89, %v69, 0
    %v94 = vsel %vm89, %v70, 0
    %96 = vmatprep.subr.bf16.mxu0 0
    %97 = vmatpush1.bf16.msra.mxu0 %v83
    %98 = vmatprep.subr.bf16.mxu0 0
    %99 = vmatpush1.bf16.msra.mxu0 %v84
    %100 = vmatprep.subr.bf16.mxu0 0
    %101 = vmatpush1.bf16.msra.mxu0 %v85
    %102 = vmatprep.subr.bf16.mxu0 0
    %103 = vmatpush1.bf16.msra.mxu0 0
    %104 = vmatprep.subr.bf16.mxu0 0
    %105 = vmatpush1.bf16.msra.mxu0 0
    %106 = vmatprep.subr.bf16.mxu0 0
    %107 = vmatpush1.bf16.msra.mxu0 0
    %108 = vmatprep.subr.bf16.mxu0 0
    %109 = vmatpush1.bf16.msra.mxu0 0
    %110 = vmatprep.subr.bf16.mxu0 0
    %111 = vmatpush1.bf16.msra.mxu0 0
    %112 = vmatprep.subr.bf16.mxu0 0
    %113 = vmatpush1.bf16.msra.mxu0 0
    %114 = vmatprep.subr.bf16.mxu0 0
    %115 = vmatpush1.bf16.msra.mxu0 0
    %116 = vmatprep.subr.bf16.mxu0 0
    %117 = vmatpush1.bf16.msra.mxu0 0
    %118 = vmatprep.subr.bf16.mxu0 0
    %119 = vmatpush1.bf16.msra.mxu0 0
    %120 = vmatprep.subr.bf16.mxu0 0
    %121 = vmatpush1.bf16.msra.mxu0 0
    %122 = vmatprep.subr.bf16.mxu0 0
    %123 = vmatpush1.bf16.msra.mxu0 0
    %124 = vmatprep.subr.bf16.mxu0 0
    %125 = vmatpush1.bf16.msra.mxu0 0
    %126 = vmatprep.subr.bf16.mxu0 0
    %127 = vmatpush1.bf16.msra.mxu0 0
    %128 = vmatprep.mubr.bf16.mxu0 0
    %129 = vmatmul.mubr.bf16.gmra.mrb[0].mxu0 %v91
    %v130 = vpop.f32.mrb[0].mxu0
    %v131 = vadd.f32 %v59, %v130
    %v132 = vpop.f32.mrb[0].mxu0
    %v133 = vpop.f32.mrb[0].mxu0
    %v134 = vadd.f32 %v59, %v133
    %v135 = vpop.f32.mrb[0].mxu0
    %136 = vmatprep.mubr.bf16.mxu0 0
    %137 = vmatmul.mubr.bf16.gmra.mrb[0].mxu0 %v94
    %v138 = vpop.f32.mrb[0].mxu0
    %v139 = vadd.f32 %v59, %v138
    %v140 = vpop.f32.mrb[0].mxu0
    %v141 = vpop.f32.mrb[0].mxu0
    %v142 = vadd.f32 %v59, %v141
    %v143 = vpop.f32.mrb[0].mxu0
    %144 = vdwg.mxu0
    %v145 = vpack.c.bf16 %v134, %v131
    %v146 = vpack.c.bf16 %v142, %v139
    %v149 = vunpack.c.l.b16 %v145
    %v150 = vunpack.c.h.b16 %v145
    %v151 = vunpack.c.l.b16 %v146
    %v152 = vunpack.c.h.b16 %v146
    %v153 = vpack.c.b16 %v149, %v149
    %v154 = vpack.c.b16 %v150, %v150
    %v155 = vpack.c.b16 %v151, %v151
    %v156 = vpack.c.b16 %v152, %v152
    %vm161 = vcmask 781312
    %162 = vst.msk [vmem:[#allocation7] sm:$0xf] %vm161, %v153
    %163 = vst.msk [vmem:[#allocation7 + $0x4] sm:$0xf] %vm161, %v154
    %164 = vst.msk [vmem:[#allocation7 + $0x8] sm:$0xf] %vm161, %v155
    %165 = vst.msk [vmem:[#allocation7 + $0xc] sm:$0xf] %vm161, %v156
    // Predicated region
    $region22: #{tpu_custom_call.1} parent=1 // pred_check
      _
    $region23: #{tpu_custom_call.1} parent=1 // pred_check_branch
      %167 = sbr.rel (0) target = $region25
    $region24: #{tpu_custom_call.1} parent=1 // pred_region
      %s169 = ssub.s32 256, 256
      %170 = vsyncadd [#allocation4], %s169
      %s171 = sshll.u32 [#allocation7], 4
      %s172 = int_to_ptr.vmem [resolvable:$true] %s171
      %177 = dma.vmem_to_hbm [thread:$0]  %s172, 256, %s3, [#allocation4], 64, 64, 4
    $region25: #{tpu_custom_call.1} parent=1 // pred_fallthru
      _
    // Predicated region
    $region26: #{tpu_custom_call.1} parent=1 // pred_check
      _
    $region27: #{tpu_custom_call.1} parent=1 // pred_check_branch
      %179 = sbr.rel (0) target = $region29
    $region28: #{tpu_custom_call.1} parent=1 // pred_region
      %180 = dma.done [#allocation4], 256
    $region29: #{tpu_custom_call.1} parent=1 // pred_fallthru
      _
    %181 = vsyncpa [#allocation3], 1
    %182 = vsyncpa [#allocation6], 1
    %183 = vsyncpa [#allocation4], 1

</llo_original>
